<compile_context>
chip_gen: v7x
topology: tpu7x:2x2x1
jax: 0.10.0
libtpu: 0.0.40
codegen_flags: <defaults>
</compile_context>

<pallas_src>
import functools

import jax
import jax.numpy as jnp
from jax import lax
from jax.experimental import pallas as pl
from jax.experimental.pallas import tpu as pltpu  # noqa: F401  (used when scaling up / streaming tables)


# ----------------------------------------------------------------------------------------------
# Kernel 1: ColumnEmbedding  (one-hot gather + col_id fusion in a single MXU contraction)
# ----------------------------------------------------------------------------------------------
def _column_embedding_kernel(x_ref, table_ref, out_ref, *, num_columns, max_rows):
    # x_ref:     (batch, num_columns) int32
    # table_ref: (num_columns*max_rows, num_columns*dim) f32, block-diagonal augmented table
    #            (col_id broadcast into the first col_id_dim lanes of each column's block).
    # out_ref:   (batch, num_columns*dim) f32 -- lane-dense (unmasked vst).
    x = x_ref[...]
    batch = x.shape[0]
    k = num_columns * max_rows
    iota_k = lax.broadcasted_iota(jnp.int32, (batch, k), 1)
    onehot = jnp.zeros((batch, k), jnp.float32)
    for c in range(num_columns):  # static unroll; num_columns is small
        onehot = onehot + (iota_k == (x[:, c:c + 1] + c * max_rows)).astype(jnp.float32)
    # Single contraction: (B, C*M) @ (C*M, C*dim) -> (B, C*dim). Column c's [col_id, val_emb]
    # lands in lanes [c*dim, (c+1)*dim).
    out_ref[...] = jnp.dot(onehot, table_ref[...], preferred_element_type=jnp.float32)


def build_augmented_table(tables, col_ids):
    """tables: (C, max_rows, val_emb_dim); col_ids: (C, col_id_dim)
    -> (C*max_rows, C*dim) block-diagonal table with col_id fused into each row."""
    num_columns, max_rows, val_dim = tables.shape
    col_id_dim = col_ids.shape[1]
    dim = col_id_dim + val_dim
    aug = jnp.concatenate(
        [jnp.broadcast_to(col_ids[:, None, :], (num_columns, max_rows, col_id_dim)), tables],
        axis=-1)                                                   # (C, M, dim)
    eye = jnp.eye(num_columns, dtype=aug.dtype)
    # aug_flat[c*M + m, e*dim + d] = aug[c, m, d] * (c == e)
    return jnp.einsum("cmd,ce->cmed", aug, eye).reshape(num_columns * max_rows,
                                                        num_columns * dim)


def column_embed_call(x_categ, aug_table, *, num_columns, max_rows, dim):
    batch = x_categ.shape[0]
    return pl.pallas_call(
        functools.partial(_column_embedding_kernel,
                          num_columns=num_columns, max_rows=max_rows),
        out_shape=jax.ShapeDtypeStruct((batch, num_columns * dim), jnp.float32),
    )(x_categ.astype(jnp.int32), aug_table)


# ----------------------------------------------------------------------------------------------
# Kernel 2: whole transformer stack (depth blocks), tokens flattened to rows = batch*num_columns
# ----------------------------------------------------------------------------------------------
def _layer_norm(x, g, b, eps=1e-5):
    mu = jnp.mean(x, axis=-1, keepdims=True)
    xc = x - mu
    var = jnp.mean(xc * xc, axis=-1, keepdims=True)
    return xc * lax.rsqrt(var + eps) * g + b


def _transformer_stack_kernel(x_ref, wq_ref, wk_ref, wv_ref, bq_ref, bk_ref, bv_ref,
                              wo_ref, bo_ref, g1_ref, b1_ref,
                              wf1_ref, bf1_ref, wf2_ref, bf2_ref, g2_ref, b2_ref,
                              out_ref, *, depth, heads, seq):
    # x_ref/out_ref: (rows, dim) with rows = batch*seq, rows ordered batch-major.
    x = x_ref[...]
    rows, dim = x.shape
    dh = dim // heads
    scale = 1.0 / (dh ** 0.5)

    # Block-diagonal attention mask: a token only attends within its own sample.
    gi = lax.broadcasted_iota(jnp.int32, (rows, rows), 0) // seq
    gj = lax.broadcasted_iota(jnp.int32, (rows, rows), 1) // seq
    same_sample = gi == gj

    for l in range(depth):  # static unroll over layers (weights indexed along leading axis)
        q = jnp.dot(x, wq_ref[l], preferred_element_type=jnp.float32) + bq_ref[l]
        kk = jnp.dot(x, wk_ref[l], preferred_element_type=jnp.float32) + bk_ref[l]
        v = jnp.dot(x, wv_ref[l], preferred_element_type=jnp.float32) + bv_ref[l]
        wo = wo_ref[l]

        attn = jnp.zeros((rows, dim), jnp.float32)
        for h in range(heads):  # static unroll over heads; everything stays 2-D
            sl = slice(h * dh, (h + 1) * dh)
            qh = q[:, sl]
            kh = kk[:, sl]
            vh = v[:, sl]
            s = lax.dot_general(qh, kh, (((1,), (1,)), ((), ())),
                                preferred_element_type=jnp.float32) * scale
            s = jnp.where(same_sample, s, -1e30)
            m = jnp.max(s, axis=-1, keepdims=True)
            e = jnp.exp(s - m)
            p = e / jnp.sum(e, axis=-1, keepdims=True)
            oh = jnp.dot(p, vh, preferred_element_type=jnp.float32)          # (rows, dh)
            # concat_h(O_h) @ Wo  ==  sum_h O_h @ Wo[h*dh:(h+1)*dh, :]  (avoids lane concat)
            attn = attn + jnp.dot(oh, wo[sl, :], preferred_element_type=jnp.float32)
        attn = attn + bo_ref[l]

        x = _layer_norm(x + attn, g1_ref[l], b1_ref[l])
        hdd = jnp.maximum(
            jnp.dot(x, wf1_ref[l], preferred_element_type=jnp.float32) + bf1_ref[l], 0.0)
        ff = jnp.dot(hdd, wf2_ref[l], preferred_element_type=jnp.float32) + bf2_ref[l]
        x = _layer_norm(x + ff, g2_ref[l], b2_ref[l])
        # TODO(synk): attn/ff dropout omitted -- eval/inference semantics (identity).
    out_ref[...] = x


# ----------------------------------------------------------------------------------------------
# Kernel 3: MLP head. [flat, x_cont] concat folded into split first-layer weights.
# ----------------------------------------------------------------------------------------------
def _mlp_kernel(flat_ref, cont_ref, w1f_ref, w1c_ref, b1_ref, w2_ref, b2_ref,
                w3_ref, b3_ref, out_ref):
    h = (jnp.dot(flat_ref[...], w1f_ref[...], preferred_element_type=jnp.float32)
         + jnp.dot(cont_ref[...], w1c_ref[...], preferred_element_type=jnp.float32)
         + b1_ref[...])
    h = jnp.maximum(h, 0.0)
    h = jnp.maximum(
        jnp.dot(h, w2_ref[...], preferred_element_type=jnp.float32) + b2_ref[...], 0.0)
    out_ref[...] = jnp.dot(h, w3_ref[...], preferred_element_type=jnp.float32) + b3_ref[...]


# ----------------------------------------------------------------------------------------------
# Full forward
# ----------------------------------------------------------------------------------------------
@functools.partial(jax.jit, static_argnames=("num_columns", "max_rows", "dim", "depth", "heads"))
def tab_transformer_forward(x_categ, x_cont, aug_table, blocks, mlp, *,
                            num_columns, max_rows, dim, depth, heads):
    batch = x_categ.shape[0]
    cat_flat = column_embed_call(x_categ, aug_table,
                                 num_columns=num_columns, max_rows=max_rows, dim=dim)
    # Free, contiguous reshape: (B, C*dim) -> (B*C, dim), rows batch-major.
    rows = cat_flat.reshape(batch * num_columns, dim)
    rows = pl.pallas_call(
        functools.partial(_transformer_stack_kernel,
                          depth=depth, heads=heads, seq=num_columns),
        out_shape=jax.ShapeDtypeStruct(rows.shape, jnp.float32),
    )(rows,
      blocks["wq"], blocks["wk"], blocks["wv"],
      blocks["bq"], blocks["bk"], blocks["bv"],
      blocks["wo"], blocks["bo"],
      blocks["ln1_g"], blocks["ln1_b"],
      blocks["wf1"], blocks["bf1"], blocks["wf2"], blocks["bf2"],
      blocks["ln2_g"], blocks["ln2_b"])
    flat = rows.reshape(batch, num_columns * dim)     # == trans_out.flatten(1)
    out = pl.pallas_call(
        _mlp_kernel,
        out_shape=jax.ShapeDtypeStruct((batch, mlp["w3"].shape[1]), jnp.float32),
    )(flat, x_cont, mlp["w1f"], mlp["w1c"], mlp["b1"], mlp["w2"], mlp["b2"],
      mlp["w3"], mlp["b3"])
    return out


# ----------------------------------------------------------------------------------------------
# Pure-JAX reference (HIGHEST precision matmuls), mirroring the PyTorch forward.
# ----------------------------------------------------------------------------------------------
def _ref_layer_norm(x, g, b, eps=1e-5):
    mu = jnp.mean(x, axis=-1, keepdims=True)
    xc = x - mu
    var = jnp.mean(xc * xc, axis=-1, keepdims=True)
    return xc * lax.rsqrt(var + eps) * g + b


def _reference_column_embedding(x_categ, tables, col_ids):
    batch, num_columns = x_categ.shape
    outs = []
    for c in range(num_columns):
        val = tables[c][x_categ[:, c]]
        cid = jnp.broadcast_to(col_ids[c][None, :], (batch, col_ids.shape[1]))
        outs.append(jnp.concatenate([cid, val], axis=-1))
    return jnp.stack(outs, axis=1)          # (B, C, dim)


def _reference_forward(x_categ, x_cont, col_ids, tables, blocks, mlp, *, depth, heads, dim):
    hp = lax.Precision.HIGHEST
    batch, num_columns = x_categ.shape
    dh = dim // heads
    scale = 1.0 / (dh ** 0.5)
    x = _reference_column_embedding(x_categ, tables, col_ids)       # (B, S, D)
    for l in range(depth):
        q = jnp.einsum("bsd,de->bse", x, blocks["wq"][l], precision=hp) + blocks["bq"][l][0]
        k = jnp.einsum("bsd,de->bse", x, blocks["wk"][l], precision=hp) + blocks["bk"][l][0]
        v = jnp.einsum("bsd,de->bse", x, blocks["wv"][l], precision=hp) + blocks["bv"][l][0]
        q = q.reshape(batch, num_columns, heads, dh)
        k = k.reshape(batch, num_columns, heads, dh)
        v = v.reshape(batch, num_columns, heads, dh)
        s = jnp.einsum("bqhd,bkhd->bhqk", q, k, precision=hp) * scale
        p = jax.nn.softmax(s, axis=-1)
        o = jnp.einsum("bhqk,bkhd->bqhd", p, v, precision=hp).reshape(batch, num_columns, dim)
        attn = jnp.einsum("bsd,de->bse", o, blocks["wo"][l], precision=hp) + blocks["bo"][l][0]
        x = _ref_layer_norm(x + attn, blocks["ln1_g"][l][0], blocks["ln1_b"][l][0])
        h = jax.nn.relu(jnp.einsum("bsd,df->bsf", x, blocks["wf1"][l], precision=hp)
                        + blocks["bf1"][l][0])
        ff = jnp.einsum("bsf,fd->bsd", h, blocks["wf2"][l], precision=hp) + blocks["bf2"][l][0]
        x = _ref_layer_norm(x + ff, blocks["ln2_g"][l][0], blocks["ln2_b"][l][0])
    flat = x.reshape(batch, num_columns * dim)
    h = jax.nn.relu(jnp.dot(flat, mlp["w1f"], precision=hp)
                    + jnp.dot(x_cont, mlp["w1c"], precision=hp) + mlp["b1"])
    h = jax.nn.relu(jnp.dot(h, mlp["w2"], precision=hp) + mlp["b2"])
    return jnp.dot(h, mlp["w3"], precision=hp) + mlp["b3"]


# ----------------------------------------------------------------------------------------------
if __name__ == "__main__":
    # Small-but-representative config (dim/heads match module defaults, depth kept small).
    categories = [7, 5, 3, 6]
    num_columns = len(categories)
    dim = 32
    heads = 8
    depth = 2
    num_continuous = 6
    dim_out = 1
    mlp_hidden_mults = (4, 2)
    batch = 8
    assert dim % heads == 0

    col_id_dim = max(1, dim // 8)
    val_emb_dim = dim - col_id_dim
    max_rows = max(categories) + 1

    key = jax.random.PRNGKey(0)
    keys = jax.random.split(key, 6)

    # --- ColumnEmbedding parameters -----------------------------------------------------------
    col_ids = jax.random.normal(keys[0], (num_columns, col_id_dim), jnp.float32)
    tab_keys = jax.random.split(keys[1], num_columns)
    tables = []
    for i, num_cat in enumerate(categories):
        w = jax.random.normal(tab_keys[i], (num_cat + 1, val_emb_dim), jnp.float32)
        pad = jnp.zeros((max_rows - (num_cat + 1), val_emb_dim), jnp.float32)
        tables.append(jnp.concatenate([w, pad], axis=0))
    tables = jnp.stack(tables, axis=0)                          # (C, max_rows, val_emb_dim)
    aug_table = build_augmented_table(tables, col_ids)          # (C*max_rows, C*dim)

    # --- Transformer parameters (stacked over depth) ------------------------------------------
    tkeys = jax.random.split(keys[2], 14)
    D = dim
    blocks = dict(
        wq=jax.random.normal(tkeys[0], (depth, D, D), jnp.float32) / (D ** 0.5),
        wk=jax.random.normal(tkeys[1], (depth, D, D), jnp.float32) / (D ** 0.5),
        wv=jax.random.normal(tkeys[2], (depth, D, D), jnp.float32) / (D ** 0.5),
        wo=jax.random.normal(tkeys[3], (depth, D, D), jnp.float32) / (D ** 0.5),
        bq=0.02 * jax.random.normal(tkeys[4], (depth, 1, D), jnp.float32),
        bk=0.02 * jax.random.normal(tkeys[5], (depth, 1, D), jnp.float32),
        bv=0.02 * jax.random.normal(tkeys[6], (depth, 1, D), jnp.float32),
        bo=0.02 * jax.random.normal(tkeys[7], (depth, 1, D), jnp.float32),
        ln1_g=jnp.ones((depth, 1, D), jnp.float32),
        ln1_b=jnp.zeros((depth, 1, D), jnp.float32),
        wf1=jax.random.normal(tkeys[8], (depth, D, 4 * D), jnp.float32) / (D ** 0.5),
        bf1=0.02 * jax.random.normal(tkeys[9], (depth, 1, 4 * D), jnp.float32),
        wf2=jax.random.normal(tkeys[10], (depth, 4 * D, D), jnp.float32) / ((4 * D) ** 0.5),
        bf2=0.02 * jax.random.normal(tkeys[11], (depth, 1, D), jnp.float32),
        ln2_g=jnp.ones((depth, 1, D), jnp.float32),
        ln2_b=jnp.zeros((depth, 1, D), jnp.float32),
    )

    # --- MLP head parameters -------------------------------------------------------------------
    mlp_in = dim * num_columns + num_continuous
    h1 = mlp_hidden_mults[0] * mlp_in
    h2 = mlp_hidden_mults[1] * mlp_in
    mkeys = jax.random.split(keys[3], 6)
    w1 = jax.random.normal(mkeys[0], (mlp_in, h1), jnp.float32) / (mlp_in ** 0.5)
    mlp = dict(
        w1f=w1[: dim * num_columns],                 # multiplies the flattened transformer output
        w1c=w1[dim * num_columns:],                  # multiplies x_cont (concat folded into weights)
        b1=0.02 * jax.random.normal(mkeys[1], (1, h1), jnp.float32),
        w2=jax.random.normal(mkeys[2], (h1, h2), jnp.float32) / (h1 ** 0.5),
        b2=0.02 * jax.random.normal(mkeys[3], (1, h2), jnp.float32),
        w3=jax.random.normal(mkeys[4], (h2, dim_out), jnp.float32) / (h2 ** 0.5),
        b3=0.02 * jax.random.normal(mkeys[5], (1, dim_out), jnp.float32),
    )

    # --- Inputs ---------------------------------------------------------------------------------
    xkeys = jax.random.split(keys[4], num_columns)
    x_cols = [jax.random.randint(xkeys[i], (batch,), 0, categories[i] + 1, dtype=jnp.int32)
              for i in range(num_columns)]
    x_categ = jnp.stack(x_cols, axis=1)                          # (batch, num_columns)
    x_cont = jax.random.normal(keys[5], (batch, num_continuous), jnp.float32)

    # --- Check the ColumnEmbedding kernel against the exact gather reference -------------------
    cat_flat = column_embed_call(x_categ, aug_table,
                                 num_columns=num_columns, max_rows=max_rows, dim=dim)
    cat_flat = jax.block_until_ready(cat_flat)
    assert cat_flat.shape == (batch, num_columns * dim), cat_flat.shape
    cat_ref = _reference_column_embedding(x_categ, tables, col_ids)
    assert jnp.allclose(cat_flat.reshape(batch, num_columns, dim), cat_ref,
                        atol=1e-5, rtol=1e-5), "ColumnEmbedding kernel mismatch"

    # --- Full forward ---------------------------------------------------------------------------
    out = tab_transformer_forward(x_categ, x_cont, aug_table, blocks, mlp,
                                  num_columns=num_columns, max_rows=max_rows, dim=dim,
                                  depth=depth, heads=heads)
    out = jax.block_until_ready(out)
    assert out.shape == (batch, dim_out), out.shape

    ref = _reference_forward(x_categ, x_cont, col_ids, tables, blocks, mlp,
                             depth=depth, heads=heads, dim=dim)
    assert jnp.allclose(out, ref, atol=2e-3, rtol=2e-3), \
        f"TabTransformer mismatch, max abs diff {jnp.max(jnp.abs(out - ref))}"

    print("KERNEL_OK")
</pallas_src>

<mosaic_0001>
module attributes {stable_mosaic.version = 11 : i64} {
  func.func @_column_embedding_kernel(%arg0: memref<8x4xi32, #tpu.memory_space<vmem>>, %arg1: memref<32x128xf32, #tpu.memory_space<vmem>>, %arg2: memref<8x128xf32, #tpu.memory_space<vmem>>) attributes {dimension_semantics = [], scalar_prefetch = 0 : i64, scratch_operands = 0 : i64, tpu.core_type = #tpu.core_type<tc>} {
    %c0 = arith.constant 0 : index
    %c0_0 = arith.constant 0 : index
    %0 = vector.load %arg0[%c0, %c0_0] : memref<8x4xi32, #tpu.memory_space<vmem>>, vector<8x4xi32>
    %1 = tpu.iota {dimensions = array<i32: 1>} : vector<8x32xi32>
    %cst = arith.constant 0.000000e+00 : f32
    %2 = vector.broadcast %cst : f32 to vector<8x32xf32>
    %3 = vector.extract_strided_slice %0 {offsets = [0, 0], sizes = [8, 1], strides = [1, 1]} : vector<8x4xi32> to vector<8x1xi32>
    %c0_i32 = arith.constant 0 : i32
    %4 = vector.broadcast %c0_i32 : i32 to vector<8x1xi32>
    %5 = arith.addi %3, %4 : vector<8x1xi32>
    %6 = vector.broadcast %5 : vector<8x1xi32> to vector<8x32xi32>
    %7 = arith.cmpi eq, %1, %6 : vector<8x32xi32>
    %8 = arith.extui %7 : vector<8x32xi1> to vector<8x32xi32>
    %9 = arith.sitofp %8 : vector<8x32xi32> to vector<8x32xf32>
    %10 = arith.addf %2, %9 : vector<8x32xf32>
    %11 = vector.extract_strided_slice %0 {offsets = [0, 1], sizes = [8, 1], strides = [1, 1]} : vector<8x4xi32> to vector<8x1xi32>
    %c8_i32 = arith.constant 8 : i32
    %12 = vector.broadcast %c8_i32 : i32 to vector<8x1xi32>
    %13 = arith.addi %11, %12 : vector<8x1xi32>
    %14 = vector.broadcast %13 : vector<8x1xi32> to vector<8x32xi32>
    %15 = arith.cmpi eq, %1, %14 : vector<8x32xi32>
    %16 = arith.extui %15 : vector<8x32xi1> to vector<8x32xi32>
    %17 = arith.sitofp %16 : vector<8x32xi32> to vector<8x32xf32>
    %18 = arith.addf %10, %17 : vector<8x32xf32>
    %19 = vector.extract_strided_slice %0 {offsets = [0, 2], sizes = [8, 1], strides = [1, 1]} : vector<8x4xi32> to vector<8x1xi32>
    %c16_i32 = arith.constant 16 : i32
    %20 = vector.broadcast %c16_i32 : i32 to vector<8x1xi32>
    %21 = arith.addi %19, %20 : vector<8x1xi32>
    %22 = vector.broadcast %21 : vector<8x1xi32> to vector<8x32xi32>
    %23 = arith.cmpi eq, %1, %22 : vector<8x32xi32>
    %24 = arith.extui %23 : vector<8x32xi1> to vector<8x32xi32>
    %25 = arith.sitofp %24 : vector<8x32xi32> to vector<8x32xf32>
    %26 = arith.addf %18, %25 : vector<8x32xf32>
    %27 = vector.extract_strided_slice %0 {offsets = [0, 3], sizes = [8, 1], strides = [1, 1]} : vector<8x4xi32> to vector<8x1xi32>
    %c24_i32 = arith.constant 24 : i32
    %28 = vector.broadcast %c24_i32 : i32 to vector<8x1xi32>
    %29 = arith.addi %27, %28 : vector<8x1xi32>
    %30 = vector.broadcast %29 : vector<8x1xi32> to vector<8x32xi32>
    %31 = arith.cmpi eq, %1, %30 : vector<8x32xi32>
    %32 = arith.extui %31 : vector<8x32xi1> to vector<8x32xi32>
    %33 = arith.sitofp %32 : vector<8x32xi32> to vector<8x32xf32>
    %34 = arith.addf %26, %33 : vector<8x32xf32>
    %c0_1 = arith.constant 0 : index
    %c0_2 = arith.constant 0 : index
    %35 = vector.load %arg1[%c0_1, %c0_2] : memref<32x128xf32, #tpu.memory_space<vmem>>, vector<32x128xf32>
    %cst_3 = arith.constant dense<0.000000e+00> : vector<8x128xf32>
    %36 = tpu.matmul %34, %35, %cst_3 {dimension_numbers = #tpu.dot_dimension_numbers<[1], [0], [0], [1], [0, 0, 1, 1], [], []>} : vector<8x32xf32>, vector<32x128xf32>, vector<8x128xf32> -> vector<8x128xf32>
    %c0_4 = arith.constant 0 : index
    %c0_5 = arith.constant 0 : index
    %37 = vector.load %arg2[%c0_4, %c0_5] : memref<8x128xf32, #tpu.memory_space<vmem>>, vector<8x128xf32>
    tpu.vector_store %arg2[%c0_4, %c0_5], %36 {strides = array<i32>} : memref<8x128xf32, #tpu.memory_space<vmem>>, vector<8x128xf32>,
    return
  }
}

</mosaic_0001>

<llo_original>
// kernel: tpu_custom_call.1
$region0: #{tpu_custom_call.1}
  #allocation0 [shape = 'u32[]', space=smem, size = 0x4, offset = 0x4, fixed_abs, tag = 'smem constant byte address 0x4 - core index']
  #allocation1 [shape = 'u32[144,128]{1,0:T(1,128)}', space=vmem, size = 0x12000, scoped, tag = 'internal scratch']
  %s0 = inlined_call_operand.vmem [shape: s32[8,4], index: 0, kind: input, shape index: {}]
  %s1 = inlined_call_operand.hbm [shape: f32[32,128], index: 1, kind: input, shape index: {}]
  %s2 = inlined_call_operand.hbm [shape: f32[8,128], index: 2, kind: output, shape index: {}]
  %s3 = sld [smem:[#allocation0]]
  $region22: #{tpu_custom_call.1} parent=0
    _
  %s5 = ssub.s32 1, %s3
  %s6 = scalar_select 0, %s5, %s3
  $region1: #{tpu_custom_call.1} parent=0
    #allocation2 [shape = 'u8[16384]{0}', space=vmem, size = 0x4000, scoped, tag = 'input window, operand 1, single buffered']
    #allocation3 [shape = 's32[1]{0}', space=sflag, size = 0x4, scoped, tag = 'scoped memory for tpu_custom_call.1']
    #allocation4 [shape = 's32[1]{0}', space=sflag, size = 0x4, scoped, tag = 'scoped memory for tpu_custom_call.1']
    #allocation5 [shape = 'u8[4096]{0}', space=vmem, size = 0x1000, scoped, tag = 'output window, operand 0, single buffered']
    %7 = vsyncpa [#allocation3], 0
    %8 = vsyncpa [#allocation4], 0
    // Predicated region
    $region2: #{tpu_custom_call.1} parent=1 // pred_check
      _
    $region3: #{tpu_custom_call.1} parent=1 // pred_check_branch
      %10 = sbr.rel (0) target = $region5
    $region4: #{tpu_custom_call.1} parent=1 // pred_region
      _
    $region5: #{tpu_custom_call.1} parent=1 // pred_fallthru
      _
    // Predicated region
    $region6: #{tpu_custom_call.1} parent=1 // pred_check
      _
    $region7: #{tpu_custom_call.1} parent=1 // pred_check_branch
      %12 = sbr.rel (0) target = $region9
    $region8: #{tpu_custom_call.1} parent=1 // pred_region
      %s14 = ssub.s32 512, 512
      %15 = vsyncadd [#allocation3], %s14
      %s16 = sshll.u32 [#allocation2], 4
      %s17 = int_to_ptr.vmem [resolvable:$true] %s16
      %22 = dma.hbm_to_vmem [thread:$0]  %s1, 512, %s17, [#allocation3], 128, 128, 8
    $region9: #{tpu_custom_call.1} parent=1 // pred_fallthru
      _
    // Predicated region
    $region10: #{tpu_custom_call.1} parent=1 // pred_check
      _
    $region11: #{tpu_custom_call.1} parent=1 // pred_check_branch
      %24 = sbr.rel (0) target = $region13
    $region12: #{tpu_custom_call.1} parent=1 // pred_region
      %25 = dma.done [#allocation3], 512
    $region13: #{tpu_custom_call.1} parent=1 // pred_fallthru
      _
    %v26 = vld [vmem:[%s0] sm:$0xff]
    %v27 = vlaneseq
    %v28 = vand.u32 %v27, 127
    %29 = vset.pattern.permute.xlu0 0
    %30 = vperm.xlu0 %29, %v26
    %v31 = vpop.permute.xlu0 %30
    %vm32 = vcmp.eq.s32.totalorder %v28, %v31
    %v33 = vsel %vm32, 1, 0
    %v34 = vcvt.s32.f32 %v33
    %v35 = vadd.f32 %v34, 0.0
    %v36 = vadd.s32 %v26, 8
    %37 = vset.pattern.permute.xlu0 1
    %38 = vperm.xlu0 %37, %v36
    %v39 = vpop.permute.xlu0 %38
    %vm40 = vcmp.eq.s32.totalorder %v28, %v39
    %v41 = vsel %vm40, 1, 0
    %v42 = vcvt.s32.f32 %v41
    %v43 = vadd.f32 %v35, %v42
    %v44 = vadd.s32 %v26, 16
    %45 = vset.pattern.permute.xlu0 2
    %46 = vperm.xlu0 %45, %v44
    %v47 = vpop.permute.xlu0 %46
    %vm48 = vcmp.eq.s32.totalorder %v28, %v47
    %v49 = vsel %vm48, 1, 0
    %v50 = vcvt.s32.f32 %v49
    %v51 = vadd.f32 %v43, %v50
    %v52 = vadd.s32 %v26, 24
    %53 = vset.pattern.permute.xlu0 3
    %54 = vperm.xlu0 %53, %v52
    %v55 = vpop.permute.xlu0 %54
    %vm56 = vcmp.eq.s32.totalorder %v28, %v55
    %v57 = vsel %vm56, 1, 0
    %v58 = vcvt.s32.f32 %v57
    %v59 = vadd.f32 %v51, %v58
    %v60 = vld [vmem:[#allocation2] sm:$0xff]
    %v61 = vld [vmem:[#allocation2 + $0x8] sm:$0xff]
    %v62 = vld [vmem:[#allocation2 + $0x10] sm:$0xff]
    %v63 = vld [vmem:[#allocation2 + $0x18] sm:$0xff]
    %vm64 = vcmask 261120
    %v66 = vsel %vm64, %v59, 0
    %68 = vmatprep.subr.mxu0 0.0
    %69 = vmatpush1.msra.mxu0 %v60
    %70 = vmatprep.subr.mxu0 0.0
    %71 = vmatpush1.msra.mxu0 %v61
    %72 = vmatprep.subr.mxu0 0.0
    %73 = vmatpush1.msra.mxu0 %v62
    %74 = vmatprep.subr.mxu0 0.0
    %75 = vmatpush1.msra.mxu0 %v63
    %76 = vmatprep.subr.mxu0 0.0
    %77 = vmatpush1.msra.mxu0 0.0
    %78 = vmatprep.subr.mxu0 0.0
    %79 = vmatpush1.msra.mxu0 0.0
    %80 = vmatprep.subr.mxu0 0.0
    %81 = vmatpush1.msra.mxu0 0.0
    %82 = vmatprep.subr.mxu0 0.0
    %83 = vmatpush1.msra.mxu0 0.0
    %84 = vmatprep.subr.mxu0 0.0
    %85 = vmatpush1.msra.mxu0 0.0
    %86 = vmatprep.subr.mxu0 0.0
    %87 = vmatpush1.msra.mxu0 0.0
    %88 = vmatprep.subr.mxu0 0.0
    %89 = vmatpush1.msra.mxu0 0.0
    %90 = vmatprep.subr.mxu0 0.0
    %91 = vmatpush1.msra.mxu0 0.0
    %92 = vmatprep.subr.mxu0 0.0
    %93 = vmatpush1.msra.mxu0 0.0
    %94 = vmatprep.subr.mxu0 0.0
    %95 = vmatpush1.msra.mxu0 0.0
    %96 = vmatprep.subr.mxu0 0.0
    %97 = vmatpush1.msra.mxu0 0.0
    %98 = vmatprep.subr.mxu0 0.0
    %99 = vmatpush1.msra.mxu0 0.0
    %100 = vmatprep.subr.mxu0 0.0
    %101 = vmatpush1.msra.mxu0 0.0
    %102 = vmatprep.subr.mxu0 0.0
    %103 = vmatpush1.msra.mxu0 0.0
    %104 = vmatprep.subr.mxu0 0.0
    %105 = vmatpush1.msra.mxu0 0.0
    %106 = vmatprep.subr.mxu0 0.0
    %107 = vmatpush1.msra.mxu0 0.0
    %108 = vmatprep.subr.mxu0 0.0
    %109 = vmatpush1.msra.mxu0 0.0
    %110 = vmatprep.subr.mxu0 0.0
    %111 = vmatpush1.msra.mxu0 0.0
    %112 = vmatprep.subr.mxu0 0.0
    %113 = vmatpush1.msra.mxu0 0.0
    %114 = vmatprep.subr.mxu0 0.0
    %115 = vmatpush1.msra.mxu0 0.0
    %116 = vmatprep.subr.mxu0 0.0
    %117 = vmatpush1.msra.mxu0 0.0
    %118 = vmatprep.subr.mxu0 0.0
    %119 = vmatpush1.msra.mxu0 0.0
    %120 = vmatprep.subr.mxu0 0.0
    %121 = vmatpush1.msra.mxu0 0.0
    %122 = vmatprep.subr.mxu0 0.0
    %123 = vmatpush1.msra.mxu0 0.0
    %124 = vmatprep.subr.mxu0 0.0
    %125 = vmatpush1.msra.mxu0 0.0
    %126 = vmatprep.subr.mxu0 0.0
    %127 = vmatpush1.msra.mxu0 0.0
    %128 = vmatprep.subr.mxu0 0.0
    %129 = vmatpush1.msra.mxu0 0.0
    %130 = vmatprep.subr.mxu0 0.0
    %131 = vmatpush1.msra.mxu0 0.0
    %132 = vmatprep.mubr.f32.mxu0 0.0
    %133 = vmatmul.mubr.f32.gmra.mrb[0].mxu0 %v66
    %v134 = vpop.f32.mrb[0].mxu0
    %v135 = vadd.f32 0.0, %v134
    %v136 = vpop.f32.mrb[0].mxu0
    %137 = vdwg.mxu0
    %138 = vst [vmem:[#allocation5] sm:$0xff] %v135
    // Predicated region
    $region14: #{tpu_custom_call.1} parent=1 // pred_check
      _
    $region15: #{tpu_custom_call.1} parent=1 // pred_check_branch
      %140 = sbr.rel (0) target = $region17
    $region16: #{tpu_custom_call.1} parent=1 // pred_region
      %s142 = ssub.s32 128, 128
      %143 = vsyncadd [#allocation4], %s142
      %s145 = sshll.u32 [#allocation5], 4
      %s146 = int_to_ptr.vmem [resolvable:$true] %s145
      %148 = dma.vmem_to_hbm [thread:$0]  %s146, 128, %s2, [#allocation4]
    $region17: #{tpu_custom_call.1} parent=1 // pred_fallthru
      _
    // Predicated region
    $region18: #{tpu_custom_call.1} parent=1 // pred_check
      _
    $region19: #{tpu_custom_call.1} parent=1 // pred_check_branch
      %150 = sbr.rel (0) target = $region21
    $region20: #{tpu_custom_call.1} parent=1 // pred_region
      %151 = dma.done [#allocation4], 128
    $region21: #{tpu_custom_call.1} parent=1 // pred_fallthru
      _
    %152 = vsyncpa [#allocation3], 1
    %153 = vsyncpa [#allocation4], 1

</llo_original>
